<compile_context>
chip_gen: v7x
topology: tpu7x:2x2x1
jax: 0.10.0
libtpu: 0.0.40
codegen_flags: <defaults>
</compile_context>

<pallas_src>
import functools

import jax
import jax.numpy as jnp
from jax.experimental import pallas as pl
from jax.experimental.pallas import tpu as pltpu


# ----------------------------- Pallas kernel ------------------------------- #
def _layer_norm_kernel(x_ref, w_ref, o_ref, *, eps):
    """Normalize each row of the (tm, D) tile over D, then scale by weight."""
    x = x_ref[...].astype(jnp.float32)                       # f32 math (autocast off)
    mean = jnp.mean(x, axis=-1, keepdims=True)
    xc = x - mean
    var = jnp.mean(xc * xc, axis=-1, keepdims=True)          # biased, like torch
    inv = jax.lax.rsqrt(var + eps)                            # EUP rsqrt (free slot)
    o_ref[...] = (xc * inv * w_ref[...]).astype(o_ref.dtype)


# --------------------------- tile-size selection --------------------------- #
def _vmem_capacity_bytes():
    try:
        return int(pltpu.get_tpu_info().vmem_capacity_bytes)
    except Exception:
        return 64 << 20  # conservative (v7x-sized) fallback


def _choose_row_tile(M, D, in_itemsize, out_itemsize):
    """Biggest row tile that fits a VMEM budget; >= 2 row blocks when M >= 16."""
    vmem_cap = _vmem_capacity_bytes()
    budget = int(vmem_cap * 0.6)                  # headroom for weight / scratch
    per_row_inflight = 2 * D * (in_itemsize + out_itemsize)  # dbl-buffered in + out
    tm = budget // max(per_row_inflight, 1)
    tm = min(tm, 8192)                            # diminishing returns past ~8k rows
    tm = (tm // 8) * 8                            # sublane alignment
    if tm < 8:
        tm = 8  # TODO(synk): D too large for one full-width row tile -> would need a D-split / two-pass variant.
    if M < 16:
        return M if M <= tm else 8                # single full-extent block (legal)
    # Cap at ~M/2 (rounded up to 8) so the parallel row axis has >= 2 blocks
    # (lets v7x's 2nd TensorCore share the work; negligible cost on v5e/v6e).
    half = ((pl.cdiv(M, 2) + 7) // 8) * 8
    return max(8, min(tm, half))


# ------------------------------- wrapper ------------------------------------ #
def layer_norm_pallas(x, weight, *, eps=1e-5, block_rows=None, out_dtype=jnp.float32):
    """LayerNorm over the last dim of `x`, scaled by `weight` ([D])."""
    orig_shape = x.shape
    D = orig_shape[-1]
    x2d = x.reshape(-1, D)                        # native dtype: no wrapper f32 cast
    M = x2d.shape[0]

    in_itemsize = x2d.dtype.itemsize
    out_itemsize = jnp.dtype(out_dtype).itemsize

    if block_rows is not None:
        tm = max(8, (int(block_rows) // 8) * 8)   # round to multiple of 8
        if M <= tm:
            tm = M
    else:
        tm = _choose_row_tile(M, D, in_itemsize, out_itemsize)

    num_blocks = pl.cdiv(M, tm)                   # no pad: partial last block is masked

    # Scoped-VMEM limit sized to the in-flight double-buffered tiles.
    in_flight = 2 * tm * D * in_itemsize + 2 * tm * D * out_itemsize + 2 * D * 4
    vmem_limit = int(min(_vmem_capacity_bytes(), max(32 << 20, in_flight + (4 << 20))))

    cost = pl.CostEstimate(
        flops=int(6 * M * D),
        transcendentals=int(M),
        bytes_accessed=int(M * D * (in_itemsize + out_itemsize) + D * 4),
    )

    w2d = weight.reshape(1, D).astype(jnp.float32)

    out = pl.pallas_call(
        functools.partial(_layer_norm_kernel, eps=eps),
        out_shape=jax.ShapeDtypeStruct((M, D), out_dtype),
        grid_spec=pl.GridSpec(
            grid=(num_blocks,),
            in_specs=[
                pl.BlockSpec((tm, D), lambda i: (i, 0)),   # row tile of x
                pl.BlockSpec((1, D), lambda i: (0, 0)),    # weight, resident
            ],
            out_specs=pl.BlockSpec((tm, D), lambda i: (i, 0)),
        ),
        compiler_params=pltpu.CompilerParams(
            dimension_semantics=("parallel",),
            vmem_limit_bytes=vmem_limit,
        ),
        cost_estimate=cost,
    )(x2d, w2d)

    return out.reshape(orig_shape)


# ------------------------------ Module port -------------------------------- #
class LayerNormPallas:
    """JAX/Pallas port of the PyTorch LayerNorm module (f32 output, like torch)."""

    def __init__(self, dim):
        self.dim = dim
        self.weight = jnp.ones((dim,), dtype=jnp.float32)   # nn.Parameter(ones)

    def __call__(self, x):
        assert x.shape[-1] == self.dim
        return layer_norm_pallas(x, self.weight)


# --------------------------------- main ------------------------------------ #
if __name__ == "__main__":
    key = jax.random.PRNGKey(0)
    k_x, k_w = jax.random.split(key)

    B, S, D = 2, 8, 256
    x = jax.random.normal(k_x, (B, S, D), dtype=jnp.float32) * 3.0 + 1.5

    model = LayerNormPallas(dim=D)
    # Give the weight a non-trivial value so the scale path is actually tested.
    model.weight = 1.0 + 0.1 * jax.random.normal(k_w, (D,), dtype=jnp.float32)

    out = model(x)
    out = jax.block_until_ready(out)

    # Plain-JAX reference of F.layer_norm(x.float(), [D]) * weight.
    mean = jnp.mean(x, axis=-1, keepdims=True)
    var = jnp.mean((x - mean) ** 2, axis=-1, keepdims=True)
    ref = (x - mean) / jnp.sqrt(var + 1e-5) * model.weight[None, None, :]

    assert out.shape == (B, S, D)
    assert out.dtype == jnp.float32
    assert jnp.allclose(out, ref, atol=1e-5, rtol=1e-5)

    # Also exercise a ragged row count (M not a multiple of the row tile) to
    # validate the masked partial-last-block path with no wrapper pad/slice.
    x_ragged = jax.random.normal(key, (3, 7, D), dtype=jnp.float32)
    out_r = jax.block_until_ready(layer_norm_pallas(x_ragged, model.weight, block_rows=8))
    mean_r = jnp.mean(x_ragged, axis=-1, keepdims=True)
    var_r = jnp.mean((x_ragged - mean_r) ** 2, axis=-1, keepdims=True)
    ref_r = (x_ragged - mean_r) / jnp.sqrt(var_r + 1e-5) * model.weight[None, None, :]
    assert jnp.allclose(out_r, ref_r, atol=1e-5, rtol=1e-5)

    print("KERNEL_OK")
</pallas_src>

<mosaic_0001>
module attributes {stable_mosaic.version = 11 : i64} {
  func.func @_layer_norm_kernel(%arg0: i32, %arg1: memref<8x256xf32, #tpu.memory_space<vmem>>, %arg2: memref<1x256xf32, #tpu.memory_space<vmem>>, %arg3: memref<8x256xf32, #tpu.memory_space<vmem>>) attributes {dimension_semantics = [#tpu.dimension_semantics<parallel>], iteration_bounds = array<i64: 2>, scalar_prefetch = 0 : i64, scratch_operands = 0 : i64, tpu.core_type = #tpu.core_type<tc>, window_params = [{transform_indices = @transform_0, window_bounds = array<i64: 8, 256>}, {pipeline_mode = #tpu.pipeline_mode<synchronous>, transform_indices = @transform_1, window_bounds = array<i64: 1, 256>}, {transform_indices = @transform_2, window_bounds = array<i64: 8, 256>}]} {
    %c0 = arith.constant 0 : index
    %c0_0 = arith.constant 0 : index
    %0 = vector.load %arg1[%c0, %c0_0] : memref<8x256xf32, #tpu.memory_space<vmem>>, vector<8x256xf32>
    %cst = arith.constant dense<0.000000e+00> : vector<8xf32>
    %1 = vector.multi_reduction <add>, %0, %cst [1] : vector<8x256xf32> to vector<8xf32>
    %2 = vector.shape_cast %1 : vector<8xf32> to vector<8x1xf32>
    %cst_1 = arith.constant 2.560000e+02 : f32
    %3 = vector.broadcast %cst_1 : f32 to vector<8x1xf32>
    %4 = arith.divf %2, %3 : vector<8x1xf32>
    %5 = vector.broadcast %4 : vector<8x1xf32> to vector<8x256xf32>
    %6 = arith.subf %0, %5 : vector<8x256xf32>
    %7 = arith.mulf %6, %6 : vector<8x256xf32>
    %cst_2 = arith.constant dense<0.000000e+00> : vector<8xf32>
    %8 = vector.multi_reduction <add>, %7, %cst_2 [1] : vector<8x256xf32> to vector<8xf32>
    %9 = vector.shape_cast %8 : vector<8xf32> to vector<8x1xf32>
    %cst_3 = arith.constant 2.560000e+02 : f32
    %10 = vector.broadcast %cst_3 : f32 to vector<8x1xf32>
    %11 = arith.divf %9, %10 : vector<8x1xf32>
    %cst_4 = arith.constant 9.99999974E-6 : f32
    %12 = vector.broadcast %cst_4 : f32 to vector<8x1xf32>
    %13 = arith.addf %11, %12 : vector<8x1xf32>
    %14 = math.rsqrt %13 : vector<8x1xf32>
    %15 = vector.broadcast %14 : vector<8x1xf32> to vector<8x256xf32>
    %16 = arith.mulf %6, %15 : vector<8x256xf32>
    %c0_5 = arith.constant 0 : index
    %c0_6 = arith.constant 0 : index
    %17 = vector.load %arg2[%c0_5, %c0_6] : memref<1x256xf32, #tpu.memory_space<vmem>>, vector<1x256xf32>
    %18 = vector.broadcast %17 : vector<1x256xf32> to vector<8x256xf32>
    %19 = arith.mulf %16, %18 : vector<8x256xf32>
    %c0_7 = arith.constant 0 : index
    %c0_8 = arith.constant 0 : index
    %20 = vector.load %arg3[%c0_7, %c0_8] : memref<8x256xf32, #tpu.memory_space<vmem>>, vector<8x256xf32>
    tpu.vector_store %arg3[%c0_7, %c0_8], %19 {strides = array<i32>} : memref<8x256xf32, #tpu.memory_space<vmem>>, vector<8x256xf32>,
    return
  }
  func.func @transform_0(%arg0: i32) -> (i32, i32) {
    %c0_i32 = arith.constant 0 : i32
    %c0_i32_0 = arith.constant 0 : i32
    return %arg0, %c0_i32 : i32, i32
  }
  func.func @transform_1(%arg0: i32) -> (i32, i32) {
    %c0_i32 = arith.constant 0 : i32
    %c0_i32_0 = arith.constant 0 : i32
    %c0_i32_1 = arith.constant 0 : i32
    return %c0_i32, %c0_i32_0 : i32, i32
  }
  func.func @transform_2(%arg0: i32) -> (i32, i32) {
    %c0_i32 = arith.constant 0 : i32
    %c0_i32_0 = arith.constant 0 : i32
    return %arg0, %c0_i32 : i32, i32
  }
}

</mosaic_0001>

<llo_original>
// kernel: tpu_custom_call.1
$region0: #{tpu_custom_call.1}
  #allocation0 [shape = 'u32[]', space=smem, size = 0x4, offset = 0x4, fixed_abs, tag = 'smem constant byte address 0x4 - core index']
  #allocation1 [shape = 'u32[144,128]{1,0:T(1,128)}', space=vmem, size = 0x12000, scoped, tag = 'internal scratch']
  %s0 = inlined_call_operand.hbm [shape: f32[16,256], index: 0, kind: input, shape index: {}]
  %s1 = inlined_call_operand.vmem [shape: f32[1,256], index: 1, kind: input, shape index: {}]
  %s2 = inlined_call_operand.hbm [shape: f32[16,256], index: 2, kind: output, shape index: {}]
  %s3 = sld [smem:[#allocation0]]
  $region45: #{tpu_custom_call.1} parent=0
    _
  %s5 = ssub.s32 1, %s3
  %s6 = scalar_select 0, %s5, %s3
  $region1: #{tpu_custom_call.1} parent=0
    #allocation2 [shape = 'u8[16384]{0}', space=vmem, size = 0x4000, scoped, tag = 'input window, operand 0']
    #allocation3 [shape = 's32[2]{0}', space=sflag, size = 0x8, scoped, tag = 'scoped memory for tpu_custom_call.1']
    #allocation4 [shape = 's32[2]{0}', space=sflag, size = 0x8, scoped, tag = 'scoped memory for tpu_custom_call.1']
    #allocation5 [shape = 'u8[16384]{0}', space=vmem, size = 0x4000, scoped, tag = 'output window, operand 0']
    %7 = vsyncpa [#allocation3], 0
    %s8 = scalar_lea.sflag [#allocation3], 1
    %9 = vsyncpa %s8, 0
    %10 = vsyncpa [#allocation4], 0
    %s11 = scalar_lea.sflag [#allocation4], 1
    %12 = vsyncpa %s11, 0
    loop: start=0, step=1, limit=4
    $region2: #{tpu_custom_call.1} parent=1 // loop_pre_header
      _
    $region3: #{tpu_custom_call.1} parent=1 // loop_header
      %s14 = sphi 0, %s18
      %p15 = scmp.ge.s32.totalorder %s14, 4
      %s24 = sphi 0, %s26
      %s27 = sphi 0, %s24
      %s28 = sphi 0, %s27
      %s44 = sphi 0, %s28
      %s48 = sphi 0, %s48
      %s50 = sphi 0, %s48
      %s51 = sphi 0, %s50
      %s65 = sphi 0, %s51
      %s71 = sphi 0, %s73
      %s74 = sphi 0, %s71
      %s75 = sphi 0, %s74
      %s91 = sphi 0, %s75
    $region4: #{tpu_custom_call.1} parent=1 // loop_header_branch
      %17 = sbr.rel (%p15) target = $region8
    $region5: #{tpu_custom_call.1} parent=1 // loop_body
      %s19 = ssub.s32 %s14, 1
      %s20 = ssub.s32 %s14, 2
      %s21 = sadd.s32 %s14, 1
      %s22 = ssub.s32 %s14, %s21
      %p23 = scmp.eq.s32.totalorder %s22, 0
      %s25 = sadd.s32 %s24, 1
      %s26 = scalar_select %p23, %s24, %s25
      %p29 = pneg %p23
      %p30 = scmp.eq.s32.totalorder %s14, 1
      %p31 = por %p29, %p30
      %p32 = scmp.ne.s32.totalorder %s24, %s27
      %p33 = scmp.eq.s32.totalorder %s14, 0
      %p34 = por %p32, %p33
      %p35 = scmp.ne.s32.totalorder %s24, %s27
      %p36 = scmp.eq.s32.totalorder %s19, 1
      %p37 = por %p35, %p36
      %p38 = scmp.ne.s32.totalorder %s27, %s28
      %p39 = scmp.eq.s32.totalorder %s19, 0
      %p40 = por %p38, %p39
      %p41 = scmp.ne.s32.totalorder %s27, %s28
      %p42 = scmp.eq.s32.totalorder %s20, 1
      %p43 = por %p41, %p42
      %p45 = scmp.ne.s32.totalorder %s28, %s44
      %p46 = scmp.eq.s32.totalorder %s20, 0
      %p47 = por %p45, %p46
      %s49 = sadd.s32 %s48, 1
      %p52 = scmp.eq.s32.totalorder %s14, 1
      %p53 = scmp.ne.s32.totalorder %s48, %s50
      %p54 = scmp.eq.s32.totalorder %s14, 0
      %p55 = por %p53, %p54
      %p56 = scmp.ne.s32.totalorder %s48, %s50
      %p57 = scmp.eq.s32.totalorder %s19, 1
      %p58 = por %p56, %p57
      %p59 = scmp.ne.s32.totalorder %s50, %s51
      %p60 = scmp.eq.s32.totalorder %s19, 0
      %p61 = por %p59, %p60
      %p62 = scmp.ne.s32.totalorder %s50, %s51
      %p63 = scmp.eq.s32.totalorder %s20, 1
      %p64 = por %p62, %p63
      %p66 = scmp.ne.s32.totalorder %s51, %s65
      %p67 = scmp.eq.s32.totalorder %s20, 0
      %p68 = por %p66, %p67
      %s69 = ssub.s32 %s14, %s21
      %p70 = scmp.eq.s32.totalorder %s69, 0
      %s72 = sadd.s32 %s71, 1
      %s73 = scalar_select %p70, %s71, %s72
      %p76 = pneg %p70
      %p77 = scmp.eq.s32.totalorder %s14, 1
      %p78 = por %p76, %p77
      %p79 = scmp.ne.s32.totalorder %s71, %s74
      %p80 = scmp.eq.s32.totalorder %s14, 0
      %p81 = por %p79, %p80
      %p82 = scmp.ne.s32.totalorder %s71, %s74
      %p83 = scmp.eq.s32.totalorder %s19, 1
      %p84 = por %p82, %p83
      %p85 = scmp.ne.s32.totalorder %s74, %s75
      %p86 = scmp.eq.s32.totalorder %s19, 0
      %p87 = por %p85, %p86
      %p88 = scmp.ne.s32.totalorder %s74, %s75
      %p89 = scmp.eq.s32.totalorder %s20, 1
      %p90 = por %p88, %p89
      %p92 = scmp.ne.s32.totalorder %s75, %s91
      %p93 = scmp.eq.s32.totalorder %s20, 0
      %p94 = por %p92, %p93
      %p95 = scmp.le.s32.totalorder 1, %s14
      %p96 = scmp.lt.s32.totalorder %s14, 3
      %p97 = pnand %p95, %p96
      %p98 = pneg %p97
      // Predicated region
      $region9: #{tpu_custom_call.1} parent=5 // pred_check
        _
      $region10: #{tpu_custom_call.1} parent=5 // pred_check_branch
        %100 = sbr.rel (%p97) target = $region12
      $region11: #{tpu_custom_call.1} parent=5 // pred_region
        %s101 = ssub.s32 %s14, 1
        // Predicated region
        $region13: #{tpu_custom_call.1} parent=11 // pred_check
          %p102 = pneg %p61
        $region14: #{tpu_custom_call.1} parent=11 // pred_check_branch
          %104 = sbr.rel (%p102) target = $region16
        $region15: #{tpu_custom_call.1} parent=11 // pred_region
          _
        $region16: #{tpu_custom_call.1} parent=11 // pred_fallthru
          _
      $region12: #{tpu_custom_call.1} parent=5 // pred_fallthru
        _
      %p105 = scmp.lt.s32.totalorder %s14, 2
      // Predicated region
      $region17: #{tpu_custom_call.1} parent=5 // pred_check
        %p106 = pneg %p105
      $region18: #{tpu_custom_call.1} parent=5 // pred_check_branch
        %108 = sbr.rel (%p106) target = $region20
      $region19: #{tpu_custom_call.1} parent=5 // pred_region
        // Predicated region
        $region21: #{tpu_custom_call.1} parent=19 // pred_check
          %p109 = pneg %p34
        $region22: #{tpu_custom_call.1} parent=19 // pred_check_branch
          %111 = sbr.rel (%p109) target = $region24
        $region23: #{tpu_custom_call.1} parent=19 // pred_region
          %s112 = sand.u32 %s24, 1
          %s113 = scalar_lea.sflag [#allocation3], %s112
          %s114 = sand.u32 %s24, 1
          %s115 = smul.addr %s114, 16
          %s116 = scalar_lea.vmem [#allocation2], %s115
          %s118 = ssub.s32 256, 256
          %119 = vsyncadd %s113, %s118
          %s120 = smul.addr %s14, 2
          %s121 = smul.addr %s120, 128
          %s122 = scalar_lea.hbm %s0, %s121
          %s124 = sshll.u32 %s116, 4
          %s125 = int_to_ptr.vmem [resolvable:$true] %s124
          %127 = dma.hbm_to_vmem [thread:$0]  %s122, 256, %s125, %s113
        $region24: #{tpu_custom_call.1} parent=19 // pred_fallthru
          _
      $region20: #{tpu_custom_call.1} parent=5 // pred_fallthru
        _
      %p128 = scmp.le.s32.totalorder 1, %s14
      %p129 = scmp.lt.s32.totalorder %s14, 3
      %p130 = pnand %p128, %p129
      %p131 = pneg %p130
      // Predicated region
      $region25: #{tpu_custom_call.1} parent=5 // pred_check
        _
      $region26: #{tpu_custom_call.1} parent=5 // pred_check_branch
        %133 = sbr.rel (%p130) target = $region28
      $region27: #{tpu_custom_call.1} parent=5 // pred_region
        %s134 = ssub.s32 %s14, 1
        %s135 = sand.u32 %s27, 1
        %s136 = scalar_lea.sflag [#allocation3], %s135
        %s137 = sand.u32 %s27, 1
        %s138 = smul.addr %s137, 16
        %s139 = scalar_lea.vmem [#allocation2], %s138
        // Predicated region
        $region29: #{tpu_custom_call.1} parent=27 // pred_check
          %p140 = pneg %p40
        $region30: #{tpu_custom_call.1} parent=27 // pred_check_branch
          %142 = sbr.rel (%p140) target = $region32
        $region31: #{tpu_custom_call.1} parent=27 // pred_region
          %143 = dma.done %s136, 256
        $region32: #{tpu_custom_call.1} parent=27 // pred_fallthru
          _
        %s144 = sand.u32 %s27, 1
        %s145 = scalar_lea.sflag [#allocation3], %s144
        %s146 = sand.u32 %s27, 1
        %s147 = smul.addr %s146, 16
        %s148 = scalar_lea.vmem [#allocation2], %s147
        %p149 = pneg %p40
        %p150 = pneg %p37
        %p151 = pneg %p61
        %p152 = pneg %p58
        %p153 = pneg %p87
        %p154 = pneg %p84
        %s155 = sand.u32 %s74, 1
        %s156 = scalar_lea.sflag [#allocation4], %s155
        %s157 = sand.u32 %s74, 1
        %s158 = smul.addr %s157, 16
        %s159 = scalar_lea.vmem [#allocation5], %s158
        %v160 = vld [vmem:[%s139] sm:$0xff]
        %v161 = vld [vmem:[%s139 + $0x8] sm:$0xff]
        %v162 = vadd.f32 %v160, %v161
        %163 = vadd.xlane.f32.xlu0 %v162
        %v164 = vpop.xlane.xlu0 %163
        %v165 = vrcp.pop 256.0
        %v166 = vmul.f32 %v164, %v165
        %v167 = vsub.f32 %v160, %v166
        %v168 = vsub.f32 %v161, %v166
        %v169 = vmul.f32 %v167, %v167
        %v170 = vmul.f32 %v168, %v168
        %v171 = vadd.f32 %v169, %v170
        %172 = vadd.xlane.f32.xlu0 %v171
        %v173 = vpop.xlane.xlu0 %172
        %v174 = vmul.f32 %v173, %v165
        %v175 = vadd.f32 %v174, 1e-05
        %v176 = vrsqrt.pop %v175
        %v177 = vmul.f32 %v167, %v176
        %v178 = vmul.f32 %v168, %v176
        %v179 = vld [vmem:[%s1] sm:$0x3]
        %v181 = vlaneseq
        %v182 = vshrl.u32 %v181, 7
        %v183 = vsub.s32 0, %v182
        %v184 = vrot.slane %v179, %v183
        %v185 = vlaneseq
        %v186 = vshrl.u32 %v185, 7
        %v187 = vsub.s32 1, %v186
        %v188 = vrot.slane %v179, %v187
        %v191 = vmul.f32 %v177, %v184
        %v192 = vmul.f32 %v178, %v188
        %193 = vst [vmem:[%s159] sm:$0xff] %v191
        %194 = vst [vmem:[%s159 + $0x8] sm:$0xff] %v192
        %s195 = sand.u32 %s74, 1
        %s196 = scalar_lea.sflag [#allocation4], %s195
        %s197 = sand.u32 %s74, 1
        %s198 = smul.addr %s197, 16
        %s199 = scalar_lea.vmem [#allocation5], %s198
        // Predicated region
        $region33: #{tpu_custom_call.1} parent=27 // pred_check
          %p200 = pneg %p84
        $region34: #{tpu_custom_call.1} parent=27 // pred_check_branch
          %202 = sbr.rel (%p200) target = $region36
        $region35: #{tpu_custom_call.1} parent=27 // pred_region
          %s204 = ssub.s32 256, 256
          %205 = vsyncadd %s196, %s204
          %s206 = smul.addr %s19, 2
          %s207 = smul.addr %s206, 128
          %s208 = scalar_lea.hbm %s2, %s207
          %s210 = sshll.u32 %s199, 4
          %s211 = int_to_ptr.vmem [resolvable:$true] %s210
          %213 = dma.vmem_to_hbm [thread:$0]  %s211, 256, %s208, %s196
        $region36: #{tpu_custom_call.1} parent=27 // pred_fallthru
          _
      $region28: #{tpu_custom_call.1} parent=5 // pred_fallthru
        _
      %p214 = scmp.le.s32.totalorder 2, %s14
      // Predicated region
      $region37: #{tpu_custom_call.1} parent=5 // pred_check
        %p215 = pneg %p214
      $region38: #{tpu_custom_call.1} parent=5 // pred_check_branch
        %217 = sbr.rel (%p215) target = $region40
      $region39: #{tpu_custom_call.1} parent=5 // pred_region
        %s218 = ssub.s32 %s14, 2
        // Predicated region
        $region41: #{tpu_custom_call.1} parent=39 // pred_check
          %p219 = pneg %p90
        $region42: #{tpu_custom_call.1} parent=39 // pred_check_branch
          %221 = sbr.rel (%p219) target = $region44
        $region43: #{tpu_custom_call.1} parent=39 // pred_region
          %s222 = sand.u32 %s75, 1
          %s223 = scalar_lea.sflag [#allocation4], %s222
          %s224 = sand.u32 %s75, 1
          %s225 = smul.addr %s224, 16
          %s226 = scalar_lea.vmem [#allocation5], %s225
          %227 = dma.done %s223, 256
        $region44: #{tpu_custom_call.1} parent=39 // pred_fallthru
          _
      $region40: #{tpu_custom_call.1} parent=5 // pred_fallthru
        _
    $region6: #{tpu_custom_call.1} parent=1 // loop_footer
      %s18 = sadd.s32 1, %s14
    $region7: #{tpu_custom_call.1} parent=1 // loop_footer_branch
      %13 = sbr.rel target = $region3
    $region8: #{tpu_custom_call.1} parent=1 // loop_exit
      _
    %228 = vsyncpa [#allocation3], 1
    %s229 = scalar_lea.sflag [#allocation3], 1
    %230 = vsyncpa %s229, 1
    %231 = vsyncpa [#allocation4], 1
    %s232 = scalar_lea.sflag [#allocation4], 1
    %233 = vsyncpa %s232, 1

</llo_original>
